<compile_context>
chip_gen: v6e
topology: v6e:2x2x1
jax: 0.10.0
libtpu: 0.0.40
codegen_flags: <defaults>
</compile_context>

<pallas_src>
import functools

import jax
import jax.numpy as jnp
from jax.experimental import pallas as pl
from jax.experimental.pallas import tpu as pltpu


_LANES = 128
_MAX_TILE_ROWS = 512     # 512*128*4B = 256 KiB per MSE tile buffer


def _instance_loss_kernel(z_i_ref, z_j_ref, d1_ref, d2_ref, o_ref, *,
                          batch_size, inv_temperature,
                          d1_rows, d1_tiles, d1_count,
                          d2_rows, d2_tiles, d2_count):
    t = pl.program_id(0)
    N = 2 * batch_size

    # ---------------- contrastive NT-Xent part (grid step 0 only) -----------
    # z_i / z_j blocks are resident (index_map is constant), so this runs once
    # while the pipeline is already prefetching the next MSE tiles.
    @pl.when(t == 0)
    def _contrastive():
        zi = z_i_ref[...].astype(jnp.float32)
        zj = z_j_ref[...].astype(jnp.float32)
        z = jnp.concatenate([zi, zj], axis=0)                   # (N, D), VMEM
        # Fold 1/T into the left operand: N*D multiplies, not N^2 divides.
        lhs = (z * inv_temperature).astype(jnp.bfloat16)
        rhs = z.astype(jnp.bfloat16)
        # z @ z.T without materializing a transpose: contract dim 1 of both.
        sim = jax.lax.dot_general(
            lhs, rhs, (((1,), (1,)), ((), ())),
            preferred_element_type=jnp.float32)                 # (N, N) f32

        # Exclude the diagonal BEFORE max/sum (required for numerical safety:
        # sim[i,i] = |z_i|^2/T can exceed every other logit by >> f32 eps, so
        # any "subtract exp(diag) afterwards" scheme cancels to 0/-inf).
        # Thin (N,1)/(1,N) iotas only; one compare + one select on the VPU,
        # which is free filler under the EUP-bound exp below.
        r = jax.lax.broadcasted_iota(jnp.int32, (N, 1), 0)
        c = jax.lax.broadcasted_iota(jnp.int32, (1, N), 1)
        sim = jnp.where(r == c, jnp.float32(-1e30), sim)

        m = jnp.max(sim, axis=-1, keepdims=True)                # (N, 1)
        s = jnp.sum(jnp.exp(sim - m), axis=-1, keepdims=True)   # (N, 1)
        lse = m + jnp.log(s)                                    # (N, 1)

        # Positive logits straight from z: pos_i = <z_i, z_j>/T, and the same
        # value appears once in each half of the N rows, so
        #   sum_i pos_i = 2 * sum(z_i * z_j) / T   -- no N^2 masks needed.
        pos_sum = jnp.sum(zi * zj, keepdims=True) * inv_temperature  # (1, 1)

        # CrossEntropyLoss(reduction='sum') / N with labels == 0.
        o_ref[...] = (jnp.sum(lse, keepdims=True) - 2.0 * pos_sum) * (1.0 / N)

    # ---------------- MSE-to-0.9 parts, tiled & pipelined over the grid -----
    def _accum_mse(d_ref, rows_valid, count):
        tile_rows = d_ref.shape[0]
        x = d_ref[...].astype(jnp.float32)                      # (tile, 128)
        diff = jnp.float32(0.9) - x
        sq = diff * diff
        # Mask sublane rows past the real array (Pallas edge-block padding).
        row = (jax.lax.broadcasted_iota(jnp.int32, (tile_rows, 1), 0)
               + t * tile_rows)
        sq = jnp.where(row < rows_valid, sq, 0.0)
        o_ref[...] += jnp.sum(sq, keepdims=True) * (1.0 / count)

    @pl.when(t < d1_tiles)
    def _():
        _accum_mse(d1_ref, d1_rows, d1_count)

    @pl.when(t < d2_tiles)
    def _():
        _accum_mse(d2_ref, d2_rows, d2_count)


def _round_up(x, m):
    return (x + m - 1) // m * m


def _prep_lane_dense(x):
    """Present x as a lane-dense (rows, 128) f32 slab.

    When numel % 128 == 0 (typical C*H*W image batches) this is a copy-free
    reshape; otherwise only the <128-element tail is padded with 0.9 so the
    padding contributes 0 to the squared error."""
    x = jnp.asarray(x, jnp.float32)
    n = int(x.size)
    flat = x.reshape(-1)
    rem = (-n) % _LANES
    if rem:
        flat = jnp.concatenate(
            [flat, jnp.full((rem,), 0.9, dtype=jnp.float32)])
    return flat.reshape(-1, _LANES), n


def instance_loss(z_i, z_j, data_dx1, data_dx2, temperature=1.0):
    z_i = jnp.asarray(z_i, jnp.float32)
    z_j = jnp.asarray(z_j, jnp.float32)
    B, D = z_i.shape
    N = 2 * B

    d1_2d, d1_count = _prep_lane_dense(data_dx1)
    d2_2d, d2_count = _prep_lane_dense(data_dx2)
    d1_rows, d2_rows = int(d1_2d.shape[0]), int(d2_2d.shape[0])

    d1_tile = min(_MAX_TILE_ROWS, _round_up(d1_rows, 8))
    d2_tile = min(_MAX_TILE_ROWS, _round_up(d2_rows, 8))
    d1_tiles = int(pl.cdiv(d1_rows, d1_tile))
    d2_tiles = int(pl.cdiv(d2_rows, d2_tile))
    num_steps = max(d1_tiles, d2_tiles, 1)

    kernel = functools.partial(
        _instance_loss_kernel,
        batch_size=B,
        inv_temperature=1.0 / float(temperature),
        d1_rows=d1_rows, d1_tiles=d1_tiles, d1_count=d1_count,
        d2_rows=d2_rows, d2_tiles=d2_tiles, d2_count=d2_count,
    )

    # VMEM estimate: z operands, a few NxN f32 temporaries, double-buffered
    # MSE tiles, plus slack for compiler internals.
    vmem_est = 4 * (4 * B * D + 6 * N * N
                    + 2 * 2 * (d1_tile + d2_tile) * _LANES) + (4 << 20)
    vmem_limit = int(min(max(vmem_est, 16 << 20), 64 << 20))

    out = pl.pallas_call(
        kernel,
        out_shape=jax.ShapeDtypeStruct((1, 1), jnp.float32),
        grid=(num_steps,),
        in_specs=[
            # z_i / z_j: constant block index -> fetched once, stay resident.
            pl.BlockSpec((B, D), lambda t: (0, 0)),
            pl.BlockSpec((B, D), lambda t: (0, 0)),
            # MSE slabs: streamed tile-by-tile; clamp the block index once the
            # (shorter) slab runs out so no re-DMA and no double counting
            # (accumulation is guarded by pl.when(t < tiles) in the kernel).
            pl.BlockSpec((d1_tile, _LANES),
                         lambda t: (jnp.minimum(t, d1_tiles - 1), 0)),
            pl.BlockSpec((d2_tile, _LANES),
                         lambda t: (jnp.minimum(t, d2_tiles - 1), 0)),
        ],
        out_specs=pl.BlockSpec((1, 1), lambda t: (0, 0)),
        compiler_params=pltpu.CompilerParams(
            dimension_semantics=("arbitrary",),
            vmem_limit_bytes=vmem_limit),
    )(z_i, z_j, d1_2d, d2_2d)
    return out[0, 0]


def reference_loss(z_i, z_j, d1, d2, temperature=1.0):
    """Pure-JAX f32 mirror of the PyTorch forward (for verification)."""
    B = z_i.shape[0]
    N = 2 * B
    z = jnp.concatenate([z_i, z_j], axis=0).astype(jnp.float32)
    sim = (z @ z.T) / temperature
    pos = jnp.concatenate(
        [jnp.diagonal(sim, offset=B), jnp.diagonal(sim, offset=-B)], axis=0)
    masked = jnp.where(jnp.eye(N, dtype=bool), -jnp.inf, sim)
    lse = jax.scipy.special.logsumexp(masked, axis=-1)
    loss = jnp.sum(lse - pos) / N
    loss = loss + jnp.mean((0.9 - d1.astype(jnp.float32)) ** 2)
    loss = loss + jnp.mean((0.9 - d2.astype(jnp.float32)) ** 2)
    return loss


def _check(out, ref, tag):
    out = jax.block_until_ready(out)
    # bf16 MXU operands (f32 accumulation) introduce ~1e-3 relative rounding
    # vs the all-f32 reference; tolerance relaxed per the review's guidance.
    assert jnp.allclose(out, ref, rtol=1e-2, atol=1e-2), (tag, out, ref)


if __name__ == "__main__":
    key = jax.random.PRNGKey(0)
    k1, k2, k3, k4, k5, k6, k7, k8 = jax.random.split(key, 8)

    # --- test 1: shapes matching the original toy setup --------------------
    B, D = 8, 32                        # batch_size=8 -> N=16 logit rows
    z_i = jax.random.normal(k1, (B, D), dtype=jnp.float32)
    z_j = jax.random.normal(k2, (B, D), dtype=jnp.float32)
    data_dx1 = jax.random.uniform(k3, (2, 4, 16, 16), dtype=jnp.float32)
    data_dx2 = jax.random.uniform(k4, (2, 4, 16, 16), dtype=jnp.float32)

    out1 = instance_loss(z_i, z_j, data_dx1, data_dx2, temperature=1.0)
    ref1 = reference_loss(z_i, z_j, data_dx1, data_dx2, temperature=1.0)
    _check(out1, ref1, "test1")

    # --- test 2: unequal / non-128-aligned data slabs, multi-tile MSE path,
    #             temperature != 1 ------------------------------------------
    B2, D2 = 16, 64
    z_i2 = jax.random.normal(k5, (B2, D2), dtype=jnp.float32)
    z_j2 = jax.random.normal(k6, (B2, D2), dtype=jnp.float32)
    data_a = jax.random.uniform(k7, (3, 5, 33, 33), dtype=jnp.float32)   # pad path
    data_b = jax.random.uniform(k8, (2, 8, 64, 128), dtype=jnp.float32)  # 2 tiles

    out2 = instance_loss(z_i2, z_j2, data_a, data_b, temperature=0.5)
    ref2 = reference_loss(z_i2, z_j2, data_a, data_b, temperature=0.5)
    _check(out2, ref2, "test2")

    print("KERNEL_OK")
</pallas_src>

<mosaic_0001>
module attributes {stable_mosaic.version = 11 : i64} {
  func.func @_instance_loss_kernel(%arg0: i32, %arg1: memref<8x32xf32, #tpu.memory_space<vmem>>, %arg2: memref<8x32xf32, #tpu.memory_space<vmem>>, %arg3: memref<16x128xf32, #tpu.memory_space<vmem>>, %arg4: memref<16x128xf32, #tpu.memory_space<vmem>>, %arg5: memref<1x1xf32, #tpu.memory_space<vmem>>) attributes {dimension_semantics = [#tpu.dimension_semantics<arbitrary>], iteration_bounds = array<i64: 1>, scalar_prefetch = 0 : i64, scratch_operands = 0 : i64, tpu.core_type = #tpu.core_type<tc>, window_params = [{pipeline_mode = #tpu.pipeline_mode<synchronous>, transform_indices = @transform_0, window_bounds = array<i64: 8, 32>}, {pipeline_mode = #tpu.pipeline_mode<synchronous>, transform_indices = @transform_1, window_bounds = array<i64: 8, 32>}, {transform_indices = @transform_2, window_bounds = array<i64: 16, 128>}, {transform_indices = @transform_3, window_bounds = array<i64: 16, 128>}, {pipeline_mode = #tpu.pipeline_mode<synchronous>, transform_indices = @transform_4, window_bounds = array<i64: 1, 1>}]} {
    %c0_i32 = arith.constant 0 : i32
    %0 = arith.cmpi eq, %arg0, %c0_i32 : i32
    %1 = arith.extui %0 : i1 to i32
    %c0_i32_0 = arith.constant 0 : i32
    %2 = arith.cmpi ne, %1, %c0_i32_0 : i32
    scf.if %2 {
      %c0 = arith.constant 0 : index
      %c0_4 = arith.constant 0 : index
      %9 = vector.load %arg1[%c0, %c0_4] : memref<8x32xf32, #tpu.memory_space<vmem>>, vector<8x32xf32>
      %c0_5 = arith.constant 0 : index
      %c0_6 = arith.constant 0 : index
      %10 = vector.load %arg2[%c0_5, %c0_6] : memref<8x32xf32, #tpu.memory_space<vmem>>, vector<8x32xf32>
      %11 = tpu.concatenate %9, %10 in 0 : vector<8x32xf32>, vector<8x32xf32> -> vector<16x32xf32>
      %cst = arith.constant 1.000000e+00 : f32
      %12 = vector.broadcast %cst : f32 to vector<16x32xf32>
      %13 = arith.mulf %11, %12 : vector<16x32xf32>
      %14 = arith.truncf %13 : vector<16x32xf32> to vector<16x32xbf16>
      %15 = arith.truncf %11 : vector<16x32xf32> to vector<16x32xbf16>
      %cst_7 = arith.constant dense<0.000000e+00> : vector<16x16xf32>
      %16 = tpu.matmul %14, %15, %cst_7 {dimension_numbers = #tpu.dot_dimension_numbers<[1], [1], [0], [0], [0, 0, 1, 0], [], []>} : vector<16x32xbf16>, vector<16x32xbf16>, vector<16x16xf32> -> vector<16x16xf32>
      %17 = tpu.iota {dimensions = array<i32: 0>} : vector<16x1xi32>
      %18 = tpu.iota {dimensions = array<i32: 1>} : vector<1x16xi32>
      %19 = vector.broadcast %17 : vector<16x1xi32> to vector<16x16xi32>
      %20 = vector.broadcast %18 : vector<1x16xi32> to vector<16x16xi32>
      %21 = arith.cmpi eq, %19, %20 : vector<16x16xi32>
      %cst_8 = arith.constant -1.000000e+30 : f32
      %22 = vector.broadcast %cst_8 : f32 to vector<16x16xf32>
      %23 = arith.select %21, %22, %16 : vector<16x16xi1>, vector<16x16xf32>
      %cst_9 = arith.constant dense<0xFF800000> : vector<16xf32>
      %24 = vector.multi_reduction <maximumf>, %23, %cst_9 [1] : vector<16x16xf32> to vector<16xf32>
      %25 = vector.shape_cast %24 : vector<16xf32> to vector<16x1xf32>
      %26 = vector.broadcast %25 : vector<16x1xf32> to vector<16x16xf32>
      %27 = arith.subf %23, %26 : vector<16x16xf32>
      %28 = math.exp %27 : vector<16x16xf32>
      %cst_10 = arith.constant dense<0.000000e+00> : vector<16xf32>
      %29 = vector.multi_reduction <add>, %28, %cst_10 [1] : vector<16x16xf32> to vector<16xf32>
      %30 = vector.shape_cast %29 : vector<16xf32> to vector<16x1xf32>
      %31 = math.log %30 : vector<16x1xf32>
      %32 = arith.addf %25, %31 : vector<16x1xf32>
      %33 = arith.mulf %9, %10 : vector<8x32xf32>
      %34 = vector.shape_cast %33 : vector<8x32xf32> to vector<1x8x32xf32>
      %cst_11 = arith.constant dense<0.000000e+00> : vector<1xf32>
      %35 = vector.multi_reduction <add>, %34, %cst_11 [1, 2] : vector<1x8x32xf32> to vector<1xf32>
      %36 = vector.shape_cast %35 : vector<1xf32> to vector<1x1x1xf32>
      %37 = vector.extract %36[0, 0, 0] : f32 from vector<1x1x1xf32>
      %38 = vector.broadcast %37 : f32 to vector<1x1xf32>
      %cst_12 = arith.constant 1.000000e+00 : f32
      %39 = vector.broadcast %cst_12 : f32 to vector<1x1xf32>
      %40 = arith.mulf %38, %39 : vector<1x1xf32>
      %41 = vector.shape_cast %32 : vector<16x1xf32> to vector<1x16x1xf32>
      %cst_13 = arith.constant dense<0.000000e+00> : vector<1xf32>
      %42 = vector.multi_reduction <add>, %41, %cst_13 [1, 2] : vector<1x16x1xf32> to vector<1xf32>
      %43 = vector.shape_cast %42 : vector<1xf32> to vector<1x1x1xf32>
      %44 = vector.extract %43[0, 0, 0] : f32 from vector<1x1x1xf32>
      %45 = vector.broadcast %44 : f32 to vector<1x1xf32>
      %cst_14 = arith.constant 2.000000e+00 : f32
      %46 = vector.broadcast %cst_14 : f32 to vector<1x1xf32>
      %47 = arith.mulf %46, %40 : vector<1x1xf32>
      %48 = arith.subf %45, %47 : vector<1x1xf32>
      %cst_15 = arith.constant 6.250000e-02 : f32
      %49 = vector.broadcast %cst_15 : f32 to vector<1x1xf32>
      %50 = arith.mulf %48, %49 : vector<1x1xf32>
      %c0_16 = arith.constant 0 : index
      %c0_17 = arith.constant 0 : index
      %51 = vector.load %arg5[%c0_16, %c0_17] : memref<1x1xf32, #tpu.memory_space<vmem>>, vector<1x1xf32>
      tpu.vector_store %arg5[%c0_16, %c0_17], %50 {strides = array<i32>} : memref<1x1xf32, #tpu.memory_space<vmem>>, vector<1x1xf32>,
    } else {
    }
    %c1_i32 = arith.constant 1 : i32
    %3 = arith.cmpi slt, %arg0, %c1_i32 : i32
    %4 = arith.extui %3 : i1 to i32
    %c0_i32_1 = arith.constant 0 : i32
    %5 = arith.cmpi ne, %4, %c0_i32_1 : i32
    scf.if %5 {
      %c0 = arith.constant 0 : index
      %c0_4 = arith.constant 0 : index
      %9 = vector.load %arg3[%c0, %c0_4] : memref<16x128xf32, #tpu.memory_space<vmem>>, vector<16x128xf32>
      %cst = arith.constant 0.899999976 : f32
      %10 = vector.broadcast %cst : f32 to vector<16x128xf32>
      %11 = arith.subf %10, %9 : vector<16x128xf32>
      %12 = arith.mulf %11, %11 : vector<16x128xf32>
      %13 = tpu.iota {dimensions = array<i32: 0>} : vector<16x1xi32>
      %c16_i32 = arith.constant 16 : i32
      %14 = arith.muli %arg0, %c16_i32 : i32
      %15 = vector.broadcast %14 : i32 to vector<16x1xi32>
      %16 = arith.addi %13, %15 : vector<16x1xi32>
      %c16_i32_5 = arith.constant 16 : i32
      %17 = vector.broadcast %c16_i32_5 : i32 to vector<16x1xi32>
      %18 = arith.cmpi slt, %16, %17 : vector<16x1xi32>
      %cst_6 = arith.constant 0.000000e+00 : f32
      %19 = vector.shape_cast %18 : vector<16x1xi1> to vector<16x1xi1>
      %20 = vector.broadcast %19 : vector<16x1xi1> to vector<16x128xi1>
      %21 = vector.broadcast %cst_6 : f32 to vector<16x128xf32>
      %22 = arith.select %20, %12, %21 : vector<16x128xi1>, vector<16x128xf32>
      %c0_7 = arith.constant 0 : index
      %c0_8 = arith.constant 0 : index
      %23 = vector.load %arg5[%c0_7, %c0_8] : memref<1x1xf32, #tpu.memory_space<vmem>>, vector<1x1xf32>
      %24 = vector.shape_cast %22 : vector<16x128xf32> to vector<1x16x128xf32>
      %cst_9 = arith.constant dense<0.000000e+00> : vector<1xf32>
      %25 = vector.multi_reduction <add>, %24, %cst_9 [1, 2] : vector<1x16x128xf32> to vector<1xf32>
      %26 = vector.shape_cast %25 : vector<1xf32> to vector<1x1x1xf32>
      %27 = vector.extract %26[0, 0, 0] : f32 from vector<1x1x1xf32>
      %28 = vector.broadcast %27 : f32 to vector<1x1xf32>
      %cst_10 = arith.constant 4.8828125E-4 : f32
      %29 = vector.broadcast %cst_10 : f32 to vector<1x1xf32>
      %30 = arith.mulf %28, %29 : vector<1x1xf32>
      %31 = arith.addf %23, %30 : vector<1x1xf32>
      %c0_11 = arith.constant 0 : index
      %c0_12 = arith.constant 0 : index
      %32 = vector.load %arg5[%c0_11, %c0_12] : memref<1x1xf32, #tpu.memory_space<vmem>>, vector<1x1xf32>
      tpu.vector_store %arg5[%c0_11, %c0_12], %31 {strides = array<i32>} : memref<1x1xf32, #tpu.memory_space<vmem>>, vector<1x1xf32>,
    } else {
    }
    %c1_i32_2 = arith.constant 1 : i32
    %6 = arith.cmpi slt, %arg0, %c1_i32_2 : i32
    %7 = arith.extui %6 : i1 to i32
    %c0_i32_3 = arith.constant 0 : i32
    %8 = arith.cmpi ne, %7, %c0_i32_3 : i32
    scf.if %8 {
      %c0 = arith.constant 0 : index
      %c0_4 = arith.constant 0 : index
      %9 = vector.load %arg4[%c0, %c0_4] : memref<16x128xf32, #tpu.memory_space<vmem>>, vector<16x128xf32>
      %cst = arith.constant 0.899999976 : f32
      %10 = vector.broadcast %cst : f32 to vector<16x128xf32>
      %11 = arith.subf %10, %9 : vector<16x128xf32>
      %12 = arith.mulf %11, %11 : vector<16x128xf32>
      %13 = tpu.iota {dimensions = array<i32: 0>} : vector<16x1xi32>
      %c16_i32 = arith.constant 16 : i32
      %14 = arith.muli %arg0, %c16_i32 : i32
      %15 = vector.broadcast %14 : i32 to vector<16x1xi32>
      %16 = arith.addi %13, %15 : vector<16x1xi32>
      %c16_i32_5 = arith.constant 16 : i32
      %17 = vector.broadcast %c16_i32_5 : i32 to vector<16x1xi32>
      %18 = arith.cmpi slt, %16, %17 : vector<16x1xi32>
      %cst_6 = arith.constant 0.000000e+00 : f32
      %19 = vector.shape_cast %18 : vector<16x1xi1> to vector<16x1xi1>
      %20 = vector.broadcast %19 : vector<16x1xi1> to vector<16x128xi1>
      %21 = vector.broadcast %cst_6 : f32 to vector<16x128xf32>
      %22 = arith.select %20, %12, %21 : vector<16x128xi1>, vector<16x128xf32>
      %c0_7 = arith.constant 0 : index
      %c0_8 = arith.constant 0 : index
      %23 = vector.load %arg5[%c0_7, %c0_8] : memref<1x1xf32, #tpu.memory_space<vmem>>, vector<1x1xf32>
      %24 = vector.shape_cast %22 : vector<16x128xf32> to vector<1x16x128xf32>
      %cst_9 = arith.constant dense<0.000000e+00> : vector<1xf32>
      %25 = vector.multi_reduction <add>, %24, %cst_9 [1, 2] : vector<1x16x128xf32> to vector<1xf32>
      %26 = vector.shape_cast %25 : vector<1xf32> to vector<1x1x1xf32>
      %27 = vector.extract %26[0, 0, 0] : f32 from vector<1x1x1xf32>
      %28 = vector.broadcast %27 : f32 to vector<1x1xf32>
      %cst_10 = arith.constant 4.8828125E-4 : f32
      %29 = vector.broadcast %cst_10 : f32 to vector<1x1xf32>
      %30 = arith.mulf %28, %29 : vector<1x1xf32>
      %31 = arith.addf %23, %30 : vector<1x1xf32>
      %c0_11 = arith.constant 0 : index
      %c0_12 = arith.constant 0 : index
      %32 = vector.load %arg5[%c0_11, %c0_12] : memref<1x1xf32, #tpu.memory_space<vmem>>, vector<1x1xf32>
      tpu.vector_store %arg5[%c0_11, %c0_12], %31 {strides = array<i32>} : memref<1x1xf32, #tpu.memory_space<vmem>>, vector<1x1xf32>,
    } else {
    }
    return
  }
  func.func @transform_0(%arg0: i32) -> (i32, i32) {
    %c0_i32 = arith.constant 0 : i32
    %c0_i32_0 = arith.constant 0 : i32
    %c0_i32_1 = arith.constant 0 : i32
    return %c0_i32, %c0_i32_0 : i32, i32
  }
  func.func @transform_1(%arg0: i32) -> (i32, i32) {
    %c0_i32 = arith.constant 0 : i32
    %c0_i32_0 = arith.constant 0 : i32
    %c0_i32_1 = arith.constant 0 : i32
    return %c0_i32, %c0_i32_0 : i32, i32
  }
  func.func @transform_2(%arg0: i32) -> (i32, i32) {
    %c0_i32 = arith.constant 0 : i32
    %0 = arith.minsi %arg0, %c0_i32 : i32
    %c0_i32_0 = arith.constant 0 : i32
    %c0_i32_1 = arith.constant 0 : i32
    return %0, %c0_i32_0 : i32, i32
  }
  func.func @transform_3(%arg0: i32) -> (i32, i32) {
    %c0_i32 = arith.constant 0 : i32
    %0 = arith.minsi %arg0, %c0_i32 : i32
    %c0_i32_0 = arith.constant 0 : i32
    %c0_i32_1 = arith.constant 0 : i32
    return %0, %c0_i32_0 : i32, i32
  }
  func.func @transform_4(%arg0: i32) -> (i32, i32) {
    %c0_i32 = arith.constant 0 : i32
    %c0_i32_0 = arith.constant 0 : i32
    %c0_i32_1 = arith.constant 0 : i32
    return %c0_i32, %c0_i32_0 : i32, i32
  }
}

</mosaic_0001>

<llo_original>
// kernel: tpu_custom_call.1
$region0: #{tpu_custom_call.1}
  #allocation0 [shape = 'u32[]', space=smem, size = 0x4, offset = 0x4, fixed_abs, tag = 'smem constant byte address 0x4 - core index']
  #allocation1 [shape = 'u32[144,128]{1,0:T(1,128)}', space=vmem, size = 0x12000, scoped, tag = 'internal scratch']
  %s0 = inlined_call_operand.hbm [shape: f32[8,32], index: 0, kind: input, shape index: {}]
  %s1 = inlined_call_operand.hbm [shape: f32[8,32], index: 1, kind: input, shape index: {}]
  %s2 = inlined_call_operand.hbm [shape: f32[16,128], index: 2, kind: input, shape index: {}]
  %s3 = inlined_call_operand.hbm [shape: f32[16,128], index: 3, kind: input, shape index: {}]
  %s4 = inlined_call_operand.hbm [shape: f32[1,1], index: 4, kind: output, shape index: {}]
  %s5 = sld [smem:[#allocation0]]
  $region50: #{tpu_custom_call.1} parent=0
    _
  %s7 = ssub.s32 1, %s5
  %s8 = scalar_select 0, %s7, %s5
  $region1: #{tpu_custom_call.1} parent=0
    #allocation2 [shape = 'u8[4096]{0}', space=vmem, size = 0x1000, scoped, tag = 'input window, operand 0, single buffered']
    #allocation3 [shape = 's32[1]{0}', space=sflag, size = 0x4, scoped, tag = 'scoped memory for tpu_custom_call.1']
    #allocation4 [shape = 's32[1]{0}', space=sflag, size = 0x4, scoped, tag = 'scoped memory for tpu_custom_call.1']
    #allocation5 [shape = 'u8[4096]{0}', space=vmem, size = 0x1000, scoped, tag = 'input window, operand 1, single buffered']
    #allocation6 [shape = 's32[1]{0}', space=sflag, size = 0x4, scoped, tag = 'scoped memory for tpu_custom_call.1']
    #allocation7 [shape = 'u8[8192]{0}', space=vmem, size = 0x2000, scoped, tag = 'input window, operand 2, single buffered']
    #allocation8 [shape = 'u8[8192]{0}', space=vmem, size = 0x2000, scoped, tag = 'input window, operand 3, single buffered']
    #allocation9 [shape = 's32[1]{0}', space=sflag, size = 0x4, scoped, tag = 'scoped memory for tpu_custom_call.1']
    #allocation10 [shape = 'u8[512]{0}', space=vmem, size = 0x400, scoped, tag = 'output window, operand 0, single buffered']
    %9 = vsyncpa [#allocation3], 0
    %10 = vsyncpa [#allocation6], 0
    %11 = vsyncpa [#allocation9], 0
    %12 = vsyncpa [#allocation4], 0
    // Predicated region
    $region2: #{tpu_custom_call.1} parent=1 // pred_check
      _
    $region3: #{tpu_custom_call.1} parent=1 // pred_check_branch
      %14 = sbr.rel (0) target = $region5
    $region4: #{tpu_custom_call.1} parent=1 // pred_region
      %s16 = ssub.s32 128, 128
      %17 = vsyncadd [#allocation3], %s16
      %s19 = sshll.u32 [#allocation2], 4
      %s20 = int_to_ptr.vmem [resolvable:$true] %s19
      %22 = dma.hbm_to_vmem [thread:$0]  %s0, 128, %s20, [#allocation3]
    $region5: #{tpu_custom_call.1} parent=1 // pred_fallthru
      _
    // Predicated region
    $region6: #{tpu_custom_call.1} parent=1 // pred_check
      _
    $region7: #{tpu_custom_call.1} parent=1 // pred_check_branch
      %24 = sbr.rel (0) target = $region9
    $region8: #{tpu_custom_call.1} parent=1 // pred_region
      %s26 = ssub.s32 128, 128
      %27 = vsyncadd [#allocation6], %s26
      %s29 = sshll.u32 [#allocation5], 4
      %s30 = int_to_ptr.vmem [resolvable:$true] %s29
      %32 = dma.hbm_to_vmem [thread:$0]  %s1, 128, %s30, [#allocation6]
    $region9: #{tpu_custom_call.1} parent=1 // pred_fallthru
      _
    // Predicated region
    $region10: #{tpu_custom_call.1} parent=1 // pred_check
      _
    $region11: #{tpu_custom_call.1} parent=1 // pred_check_branch
      %34 = sbr.rel (0) target = $region13
    $region12: #{tpu_custom_call.1} parent=1 // pred_region
      %s36 = ssub.s32 256, 256
      %37 = vsyncadd [#allocation6], %s36
      %s38 = sshll.u32 [#allocation7], 4
      %s39 = int_to_ptr.vmem [resolvable:$true] %s38
      %44 = dma.hbm_to_vmem [thread:$0]  %s2, 256, %s39, [#allocation6], 128, 128, 8
    $region13: #{tpu_custom_call.1} parent=1 // pred_fallthru
      _
    // Predicated region
    $region14: #{tpu_custom_call.1} parent=1 // pred_check
      _
    $region15: #{tpu_custom_call.1} parent=1 // pred_check_branch
      %46 = sbr.rel (0) target = $region17
    $region16: #{tpu_custom_call.1} parent=1 // pred_region
      %s48 = ssub.s32 256, 256
      %49 = vsyncadd [#allocation9], %s48
      %s50 = sshll.u32 [#allocation8], 4
      %s51 = int_to_ptr.vmem [resolvable:$true] %s50
      %56 = dma.hbm_to_vmem [thread:$0]  %s3, 256, %s51, [#allocation9], 128, 128, 8
    $region17: #{tpu_custom_call.1} parent=1 // pred_fallthru
      _
    // Predicated region
    $region18: #{tpu_custom_call.1} parent=1 // pred_check
      _
    $region19: #{tpu_custom_call.1} parent=1 // pred_check_branch
      %58 = sbr.rel (0) target = $region21
    $region20: #{tpu_custom_call.1} parent=1 // pred_region
      %59 = dma.done [#allocation3], 128
    $region21: #{tpu_custom_call.1} parent=1 // pred_fallthru
      _
    // Predicated region
    $region22: #{tpu_custom_call.1} parent=1 // pred_check
      _
    $region23: #{tpu_custom_call.1} parent=1 // pred_check_branch
      %61 = sbr.rel (0) target = $region25
    $region24: #{tpu_custom_call.1} parent=1 // pred_region
      %62 = dma.done [#allocation6], 128
    $region25: #{tpu_custom_call.1} parent=1 // pred_fallthru
      _
    // Predicated region
    $region26: #{tpu_custom_call.1} parent=1 // pred_check
      _
    $region27: #{tpu_custom_call.1} parent=1 // pred_check_branch
      %64 = sbr.rel (0) target = $region29
    $region28: #{tpu_custom_call.1} parent=1 // pred_region
      %65 = dma.done [#allocation6], 256
    $region29: #{tpu_custom_call.1} parent=1 // pred_fallthru
      _
    // Predicated region
    $region30: #{tpu_custom_call.1} parent=1 // pred_check
      _
    $region31: #{tpu_custom_call.1} parent=1 // pred_check_branch
      %67 = sbr.rel (0) target = $region33
    $region32: #{tpu_custom_call.1} parent=1 // pred_region
      %68 = dma.done [#allocation9], 256
    $region33: #{tpu_custom_call.1} parent=1 // pred_fallthru
      _
    %p70 = scmp.eq.s32.totalorder 0, 0
    // Predicated region
    $region34: #{tpu_custom_call.1} parent=1 // pred_check
      %p71 = pneg %p70
    $region35: #{tpu_custom_call.1} parent=1 // pred_check_branch
      %73 = sbr.rel (%p71) target = $region37
    $region36: #{tpu_custom_call.1} parent=1 // pred_region
      %v74 = vld [vmem:[#allocation2] sm:$0xff]
      %v75 = vld [vmem:[#allocation5] sm:$0xff]
      %v76 = vpack.c.bf16 %v75, %v74
      %vm77 = vcmask 261120
      %v79 = vsel %vm77, %v76, 0
      %81 = vmatprep.subr.bf16.mxu0 0
      %82 = vmatpush1.bf16.xpose.msra.mxu0 0
      %83 = vmatprep.subr.bf16.mxu0 0
      %84 = vmatpush1.bf16.xpose.msra.mxu0 0
      %85 = vmatprep.subr.bf16.mxu0 0
      %86 = vmatpush1.bf16.xpose.msra.mxu0 0
      %87 = vmatprep.subr.bf16.mxu0 0
      %88 = vmatpush1.bf16.xpose.msra.mxu0 0
      %89 = vmatprep.subr.bf16.mxu0 0
      %90 = vmatpush1.bf16.xpose.msra.mxu0 0
      %91 = vmatprep.subr.bf16.mxu0 0
      %92 = vmatpush1.bf16.xpose.msra.mxu0 0
      %93 = vmatprep.subr.bf16.mxu0 0
      %94 = vmatpush1.bf16.xpose.msra.mxu0 0
      %95 = vmatprep.subr.bf16.mxu0 0
      %96 = vmatpush1.bf16.xpose.msra.mxu0 %v79
      %97 = vmatprep.subr.bf16.mxu0 0
      %98 = vmatpush2.bf16.xpose.msra.mxu0 0
      %99 = vmatprep.subr.bf16.mxu0 0
      %100 = vmatpush2.bf16.xpose.msra.mxu0 0
      %101 = vmatprep.subr.bf16.mxu0 0
      %102 = vmatpush2.bf16.xpose.msra.mxu0 0
      %103 = vmatprep.subr.bf16.mxu0 0
      %104 = vmatpush2.bf16.xpose.msra.mxu0 0
      %105 = vmatprep.subr.bf16.mxu0 0
      %106 = vmatpush2.bf16.xpose.msra.mxu0 0
      %107 = vmatprep.subr.bf16.mxu0 0
      %108 = vmatpush2.bf16.xpose.msra.mxu0 0
      %109 = vmatprep.subr.bf16.mxu0 0
      %110 = vmatpush2.bf16.xpose.msra.mxu0 0
      %111 = vmatprep.subr.bf16.mxu0 0
      %112 = vmatpush2.bf16.xpose.msra.mxu0 0
      %113 = vmatprep.mubr.bf16.mxu0 0
      %114 = vmatmul.mubr.bf16.gmra.mxu0 %v79
      %v115 = vpop.f32.mrf.mxu0
      %v116 = vadd.f32 0.0, %v115
      %v117 = vpop.f32.mrf.mxu0
      %v118 = vpop.f32.mrf.mxu0
      %v119 = vadd.f32 0.0, %v118
      %v120 = vpop.f32.mrf.mxu0
      %121 = vdwg.mxu0
      %v122 = vlaneseq
      %v123 = vshrl.u32 %v122, 7
      %v124 = vadd.s32 %v123, 8
      %v125 = vlaneseq
      %v126 = vand.u32 %v125, 127
      %vm127 = vcmp.eq.s32.totalorder %v123, %v126
      %vm128 = vcmp.eq.s32.totalorder %v124, %v126
      %v129 = vsel %vm127, -1e+30, %v116
      %v130 = vsel %vm128, -1e+30, %v119
      %vm131 = vcmask 130048
      %v132 = vsel %vm131, %v129, -inf
      %133 = vmax.xlane.f32.xlu0 %v132
      %v134 = vpop.xlane.xlu0 %133
      %v135 = vsel %vm131, %v130, -inf
      %136 = vmax.xlane.f32.xlu0 %v135
      %v137 = vpop.xlane.xlu0 %136
      %v138 = vsub.f32 %v129, %v134
      %v139 = vsub.f32 %v130, %v137
      %v140 = vmul.f32 %v138, 1.442695
      %v141 = vpow.pop %v140
      %v142 = vmul.f32 %v139, 1.442695
      %v143 = vpow.pop %v142
      %v144 = vsel %vm131, %v141, 0.0
      %145 = vadd.xlane.f32.xlu0 %v144
      %v146 = vpop.xlane.xlu0 %145
      %v147 = vsel %vm131, %v143, 0.0
      %148 = vadd.xlane.f32.xlu0 %v147
      %v149 = vpop.xlane.xlu0 %148
      %v150 = vlog2.pop %v146
      %v151 = vmul.f32 %v150, 0.6931472
      %v152 = vlog2.pop %v149
      %v153 = vmul.f32 %v152, 0.6931472
      %v154 = vadd.f32 %v134, %v151
      %v155 = vadd.f32 %v137, %v153
      %v156 = vmul.f32 %v74, %v75
      %v157 = vsel %vm77, %v156, 0.0
      %158 = vadd.xlane.f32.xlu0 %v157
      %v159 = vpop.xlane.xlu0 %158
      %v160 = vrot.slane %v159, 4
      %v161 = vadd.f32 %v159, %v160
      %v162 = vrot.slane %v161, 2
      %v163 = vadd.f32 %v161, %v162
      %v164 = vrot.slane %v163, 1
      %v165 = vadd.f32 %v163, %v164
      %s166 = vtos %v165
      %v167 = vstv %s166
      %vm168 = vcmask 7168
      %v169 = vsel %vm168, %v154, 0.0
      %v170 = vsel %vm168, %v155, 0.0
      %v171 = vadd.f32 %v169, %v170
      %172 = vadd.xlane.f32.xlu0 %v171
      %v173 = vpop.xlane.xlu0 %172
      %v174 = vrot.slane %v173, 4
      %v175 = vadd.f32 %v173, %v174
      %v176 = vrot.slane %v175, 2
      %v177 = vadd.f32 %v175, %v176
      %v178 = vrot.slane %v177, 1
      %v179 = vadd.f32 %v177, %v178
      %s180 = vtos %v179
      %v181 = vstv %s180
      %v182 = vmul.f32 %v167, 2.0
      %v183 = vsub.f32 %v181, %v182
      %v184 = vmul.f32 %v183, 0.0625
      %vm185 = vcmask 0
      %186 = vst.msk [vmem:[#allocation10] sm:$0x1] %vm185, %v184
    $region37: #{tpu_custom_call.1} parent=1 // pred_fallthru
      _
    %p187 = scmp.lt.s32.totalorder 0, 1
    // Predicated region
    $region38: #{tpu_custom_call.1} parent=1 // pred_check
      %p188 = pneg %p187
    $region39: #{tpu_custom_call.1} parent=1 // pred_check_branch
      %190 = sbr.rel (%p188) target = $region41
    $region40: #{tpu_custom_call.1} parent=1 // pred_region
      %v191 = vld [vmem:[#allocation7] sm:$0xff]
      %v192 = vld [vmem:[#allocation7 + $0x8] sm:$0xff]
      %v193 = vsub.f32 0.9, %v191
      %v194 = vsub.f32 0.9, %v192
      %v195 = vmul.f32 %v193, %v193
      %v196 = vmul.f32 %v194, %v194
      %v197 = vlaneseq
      %v198 = vshrl.u32 %v197, 7
      %v199 = vadd.s32 %v198, 8
      %s200 = smul.u32 0, 16
      %v201 = vstv %s200
      %v202 = vadd.s32 %v198, %v201
      %v203 = vadd.s32 %v199, %v201
      %vm204 = vcmp.lt.s32.totalorder %v202, 16
      %vm205 = vcmp.lt.s32.totalorder %v203, 16
      %v206 = vsel %vm204, 1, 0
      %v207 = vsel %vm205, 1, 0
      %vm208 = vcmp.eq.s32.totalorder %v206, 1
      %vm209 = vcmp.eq.s32.totalorder %v207, 1
      %v210 = vsel %vm208, %v195, 0.0
      %v211 = vsel %vm209, %v196, 0.0
      %v212 = vld [vmem:[#allocation10] sm:$0x1]
      %v213 = vadd.f32 %v210, %v211
      %214 = vadd.xlane.f32.xlu0 %v213
      %v215 = vpop.xlane.xlu0 %214
      %v216 = vrot.slane %v215, 4
      %v217 = vadd.f32 %v215, %v216
      %v218 = vrot.slane %v217, 2
      %v219 = vadd.f32 %v217, %v218
      %v220 = vrot.slane %v219, 1
      %v221 = vadd.f32 %v219, %v220
      %s222 = vtos %v221
      %v223 = vstv %s222
      %v224 = vmul.f32 %v223, 0.00048828125
      %v225 = vadd.f32 %v212, %v224
      %vm226 = vcmask 0
      %227 = vst.msk [vmem:[#allocation10] sm:$0x1] %vm226, %v225
      %v228 = vld [vmem:[#allocation8] sm:$0xff]
      %v229 = vld [vmem:[#allocation8 + $0x8] sm:$0xff]
      %v230 = vsub.f32 0.9, %v228
      %v231 = vsub.f32 0.9, %v229
      %v232 = vmul.f32 %v230, %v230
      %v233 = vmul.f32 %v231, %v231
      %v234 = vsel %vm208, %v232, 0.0
      %v235 = vsel %vm209, %v233, 0.0
      %v236 = vld [vmem:[#allocation10] sm:$0x1]
      %v237 = vadd.f32 %v234, %v235
      %238 = vadd.xlane.f32.xlu0 %v237
      %v239 = vpop.xlane.xlu0 %238
      %v240 = vrot.slane %v239, 4
      %v241 = vadd.f32 %v239, %v240
      %v242 = vrot.slane %v241, 2
      %v243 = vadd.f32 %v241, %v242
      %v244 = vrot.slane %v243, 1
      %v245 = vadd.f32 %v243, %v244
      %s246 = vtos %v245
      %v247 = vstv %s246
      %v248 = vmul.f32 %v247, 0.00048828125
      %v249 = vadd.f32 %v236, %v248
      %250 = vst.msk [vmem:[#allocation10] sm:$0x1] %vm226, %v249
    $region41: #{tpu_custom_call.1} parent=1 // pred_fallthru
      _
    // Predicated region
    $region42: #{tpu_custom_call.1} parent=1 // pred_check
      _
    $region43: #{tpu_custom_call.1} parent=1 // pred_check_branch
      %252 = sbr.rel (0) target = $region45
    $region44: #{tpu_custom_call.1} parent=1 // pred_region
      %s254 = ssub.s32 16, 16
      %255 = vsyncadd [#allocation4], %s254
      %s257 = sshll.u32 [#allocation10], 4
      %s258 = int_to_ptr.vmem [resolvable:$true] %s257
      %260 = dma.vmem_to_hbm [thread:$0]  %s258, 16, %s4, [#allocation4]
    $region45: #{tpu_custom_call.1} parent=1 // pred_fallthru
      _
    // Predicated region
    $region46: #{tpu_custom_call.1} parent=1 // pred_check
      _
    $region47: #{tpu_custom_call.1} parent=1 // pred_check_branch
      %262 = sbr.rel (0) target = $region49
    $region48: #{tpu_custom_call.1} parent=1 // pred_region
      %263 = dma.done [#allocation4], 16
    $region49: #{tpu_custom_call.1} parent=1 // pred_fallthru
      _
    %264 = vsyncpa [#allocation3], 1
    %265 = vsyncpa [#allocation6], 1
    %266 = vsyncpa [#allocation9], 1
    %267 = vsyncpa [#allocation4], 1

</llo_original>
